<compile_context>
chip_gen: v6e
topology: v6e:2x2x1
jax: 0.10.0
libtpu: 0.0.40
codegen_flags: <defaults>
</compile_context>

<pallas_src>
import math
from functools import partial

import jax
import jax.numpy as jnp
from jax.experimental import pallas as pl
from jax.experimental.pallas import tpu as pltpu


def feature_decoder_kernel(z_ref, w1_ref, b1_ref, w2_ref, b2_ref, o_ref):
    # z_ref: (bm, E), w1_ref: (E, H), b1_ref: (1, H),
    # w2_ref: (H, F), b2_ref: (1, F), o_ref: (bm, F)
    z = z_ref[...]
    h = jnp.dot(z, w1_ref[...], preferred_element_type=jnp.float32) + b1_ref[...]
    # LeakyReLU(negative_slope=0.1): max(h, 0.1*h) — pure VPU, no select/relayout.
    h = jnp.maximum(h, 0.1 * h)
    # TODO(synk): dropout omitted (inference / eval semantics -> identity).
    o_ref[...] = (jnp.dot(h, w2_ref[...], preferred_element_type=jnp.float32)
                  + b2_ref[...])


@partial(jax.jit, static_argnames=("block_rows",))
def feature_decoder_forward(z, params, block_rows=256):
    """z: (..., embed_dim) float32 -> (..., num_features) float32."""
    orig_shape = z.shape
    E = orig_shape[-1]
    z2 = z.reshape(-1, E)                       # fold all leading dims into rows
    N = z2.shape[0]

    H = params["w1"].shape[1]
    Fout = params["w2"].shape[1]

    # Row tiling: pad rows to a sublane multiple; one tile if small, otherwise
    # block_rows-sized tiles over a parallel grid axis (keeps both v7x TCs busy
    # when N is large, single launch either way).
    Np = ((N + 7) // 8) * 8
    bm = Np if Np <= block_rows else block_rows
    Np = ((Np + bm - 1) // bm) * bm
    if Np != N:
        z2 = jnp.pad(z2, ((0, Np - N), (0, 0)))

    grid = (Np // bm,)
    row_map = lambda i: (i, 0)
    shared = lambda i: (0, 0)

    out = pl.pallas_call(
        feature_decoder_kernel,
        out_shape=jax.ShapeDtypeStruct((Np, Fout), jnp.float32),
        grid=grid,
        in_specs=[
            pl.BlockSpec((bm, E), row_map),      # z rows
            pl.BlockSpec((E, H), shared),        # fc1 weight (in, out)
            pl.BlockSpec((1, H), shared),        # fc1 bias
            pl.BlockSpec((H, Fout), shared),     # fc2 weight (in, out)
            pl.BlockSpec((1, Fout), shared),     # fc2 bias
        ],
        out_specs=pl.BlockSpec((bm, Fout), row_map),
        compiler_params=pltpu.CompilerParams(
            dimension_semantics=("parallel",)),
    )(z2, params["w1"], params["b1"], params["w2"], params["b2"])

    out = out[:N]
    return out.reshape(orig_shape[:-1] + (Fout,))


def init_feature_decoder_params(key, embed_dim, num_features):
    """Mirrors FeatureDecoder.reset_parameters(): xavier_uniform_ weights,
    zero biases.  Weights stored transposed (in, out) so the kernel computes
    z @ W (identical math to PyTorch's z @ W.T with W of shape (out, in))."""
    hidden = embed_dim // 2
    k1, k2 = jax.random.split(key)

    def xavier_uniform(k, fan_in, fan_out):
        bound = math.sqrt(6.0 / (fan_in + fan_out))
        return jax.random.uniform(k, (fan_in, fan_out), jnp.float32,
                                  minval=-bound, maxval=bound)

    return {
        "w1": xavier_uniform(k1, embed_dim, hidden),
        "b1": jnp.zeros((1, hidden), jnp.float32),
        "w2": xavier_uniform(k2, hidden, num_features),
        "b2": jnp.zeros((1, num_features), jnp.float32),
    }


if __name__ == "__main__":
    # Small config consistent with the module: per-node embeddings of a graph
    # batch, decoded back to node features.
    embed_dim = 32
    num_features = 16
    batch, nodes = 2, 8

    key = jax.random.PRNGKey(0)
    kz, kp = jax.random.split(key)
    z = jax.random.normal(kz, (batch, nodes, embed_dim), jnp.float32)
    params = init_feature_decoder_params(kp, embed_dim, num_features)

    out = feature_decoder_forward(z, params)
    out = jax.block_until_ready(out)
    assert out.shape == (batch, nodes, num_features)

    # Pure-JAX reference (same math) to sanity-check the kernel result.
    zf = z.reshape(-1, embed_dim)
    h = zf @ params["w1"] + params["b1"]
    h = jnp.where(h > 0, h, 0.1 * h)
    ref = (h @ params["w2"] + params["b2"]).reshape(batch, nodes, num_features)
    assert jnp.allclose(out, ref, atol=1e-5, rtol=1e-5)

    print("KERNEL_OK")
</pallas_src>

<mosaic_0001>
module attributes {stable_mosaic.version = 11 : i64} {
  func.func @feature_decoder_kernel(%arg0: i32, %arg1: memref<16x32xf32, #tpu.memory_space<vmem>>, %arg2: memref<32x16xf32, #tpu.memory_space<vmem>>, %arg3: memref<1x16xf32, #tpu.memory_space<vmem>>, %arg4: memref<16x16xf32, #tpu.memory_space<vmem>>, %arg5: memref<1x16xf32, #tpu.memory_space<vmem>>, %arg6: memref<16x16xf32, #tpu.memory_space<vmem>>) attributes {dimension_semantics = [#tpu.dimension_semantics<parallel>], iteration_bounds = array<i64: 1>, scalar_prefetch = 0 : i64, scratch_operands = 0 : i64, tpu.core_type = #tpu.core_type<tc>, window_params = [{transform_indices = @transform_0, window_bounds = array<i64: 16, 32>}, {pipeline_mode = #tpu.pipeline_mode<synchronous>, transform_indices = @transform_1, window_bounds = array<i64: 32, 16>}, {pipeline_mode = #tpu.pipeline_mode<synchronous>, transform_indices = @transform_2, window_bounds = array<i64: 1, 16>}, {pipeline_mode = #tpu.pipeline_mode<synchronous>, transform_indices = @transform_3, window_bounds = array<i64: 16, 16>}, {pipeline_mode = #tpu.pipeline_mode<synchronous>, transform_indices = @transform_4, window_bounds = array<i64: 1, 16>}, {transform_indices = @transform_5, window_bounds = array<i64: 16, 16>}]} {
    %c0 = arith.constant 0 : index
    %c0_0 = arith.constant 0 : index
    %0 = vector.load %arg1[%c0, %c0_0] : memref<16x32xf32, #tpu.memory_space<vmem>>, vector<16x32xf32>
    %c0_1 = arith.constant 0 : index
    %c0_2 = arith.constant 0 : index
    %1 = vector.load %arg2[%c0_1, %c0_2] : memref<32x16xf32, #tpu.memory_space<vmem>>, vector<32x16xf32>
    %cst = arith.constant dense<0.000000e+00> : vector<16x16xf32>
    %2 = tpu.matmul %0, %1, %cst {dimension_numbers = #tpu.dot_dimension_numbers<[1], [0], [0], [1], [0, 0, 1, 1], [], []>} : vector<16x32xf32>, vector<32x16xf32>, vector<16x16xf32> -> vector<16x16xf32>
    %c0_3 = arith.constant 0 : index
    %c0_4 = arith.constant 0 : index
    %3 = vector.load %arg3[%c0_3, %c0_4] : memref<1x16xf32, #tpu.memory_space<vmem>>, vector<1x16xf32>
    %4 = vector.broadcast %3 : vector<1x16xf32> to vector<16x16xf32>
    %5 = arith.addf %2, %4 : vector<16x16xf32>
    %cst_5 = arith.constant 1.000000e-01 : f32
    %6 = vector.broadcast %cst_5 : f32 to vector<16x16xf32>
    %7 = arith.mulf %6, %5 : vector<16x16xf32>
    %8 = arith.maximumf %5, %7 : vector<16x16xf32>
    %c0_6 = arith.constant 0 : index
    %c0_7 = arith.constant 0 : index
    %9 = vector.load %arg4[%c0_6, %c0_7] : memref<16x16xf32, #tpu.memory_space<vmem>>, vector<16x16xf32>
    %cst_8 = arith.constant dense<0.000000e+00> : vector<16x16xf32>
    %10 = tpu.matmul %8, %9, %cst_8 {dimension_numbers = #tpu.dot_dimension_numbers<[1], [0], [0], [1], [0, 0, 1, 1], [], []>} : vector<16x16xf32>, vector<16x16xf32>, vector<16x16xf32> -> vector<16x16xf32>
    %c0_9 = arith.constant 0 : index
    %c0_10 = arith.constant 0 : index
    %11 = vector.load %arg5[%c0_9, %c0_10] : memref<1x16xf32, #tpu.memory_space<vmem>>, vector<1x16xf32>
    %12 = vector.broadcast %11 : vector<1x16xf32> to vector<16x16xf32>
    %13 = arith.addf %10, %12 : vector<16x16xf32>
    %c0_11 = arith.constant 0 : index
    %c0_12 = arith.constant 0 : index
    %14 = vector.load %arg6[%c0_11, %c0_12] : memref<16x16xf32, #tpu.memory_space<vmem>>, vector<16x16xf32>
    tpu.vector_store %arg6[%c0_11, %c0_12], %13 {strides = array<i32>} : memref<16x16xf32, #tpu.memory_space<vmem>>, vector<16x16xf32>,
    return
  }
  func.func @transform_0(%arg0: i32) -> (i32, i32) {
    %c0_i32 = arith.constant 0 : i32
    %c0_i32_0 = arith.constant 0 : i32
    return %arg0, %c0_i32 : i32, i32
  }
  func.func @transform_1(%arg0: i32) -> (i32, i32) {
    %c0_i32 = arith.constant 0 : i32
    %c0_i32_0 = arith.constant 0 : i32
    %c0_i32_1 = arith.constant 0 : i32
    return %c0_i32, %c0_i32_0 : i32, i32
  }
  func.func @transform_2(%arg0: i32) -> (i32, i32) {
    %c0_i32 = arith.constant 0 : i32
    %c0_i32_0 = arith.constant 0 : i32
    %c0_i32_1 = arith.constant 0 : i32
    return %c0_i32, %c0_i32_0 : i32, i32
  }
  func.func @transform_3(%arg0: i32) -> (i32, i32) {
    %c0_i32 = arith.constant 0 : i32
    %c0_i32_0 = arith.constant 0 : i32
    %c0_i32_1 = arith.constant 0 : i32
    return %c0_i32, %c0_i32_0 : i32, i32
  }
  func.func @transform_4(%arg0: i32) -> (i32, i32) {
    %c0_i32 = arith.constant 0 : i32
    %c0_i32_0 = arith.constant 0 : i32
    %c0_i32_1 = arith.constant 0 : i32
    return %c0_i32, %c0_i32_0 : i32, i32
  }
  func.func @transform_5(%arg0: i32) -> (i32, i32) {
    %c0_i32 = arith.constant 0 : i32
    %c0_i32_0 = arith.constant 0 : i32
    return %arg0, %c0_i32 : i32, i32
  }
}

</mosaic_0001>

<llo_original>
// kernel: feature_decoder_forward.1
$region0: #{feature_decoder_forward.1}
  #allocation0 [shape = 'u32[]', space=smem, size = 0x4, offset = 0x4, fixed_abs, tag = 'smem constant byte address 0x4 - core index']
  #allocation1 [shape = 'u32[144,128]{1,0:T(1,128)}', space=vmem, size = 0x12000, scoped, tag = 'internal scratch']
  %s0 = inlined_call_operand.vmem [shape: f32[16,32], index: 0, kind: input, shape index: {}]
  %s1 = inlined_call_operand.vmem [shape: f32[32,16], index: 1, kind: input, shape index: {}]
  %s2 = inlined_call_operand.vmem [shape: f32[1,16], index: 2, kind: input, shape index: {}]
  %s3 = inlined_call_operand.vmem [shape: f32[16,16], index: 3, kind: input, shape index: {}]
  %s4 = inlined_call_operand.vmem [shape: f32[1,16], index: 4, kind: input, shape index: {}]
  %s5 = inlined_call_operand.hbm [shape: f32[16,16], index: 5, kind: output, shape index: {}]
  %s6 = sld [smem:[#allocation0]]
  $region30: #{feature_decoder_forward.1} parent=0
    _
  %s8 = ssub.s32 1, %s6
  %s9 = scalar_select 0, %s8, %s6
  $region1: #{feature_decoder_forward.1} parent=0
    #allocation2 [shape = 'u8[8192]{0}', space=vmem, size = 0x2000, scoped, tag = 'output window, operand 0, single buffered']
    #allocation3 [shape = 's32[1]{0}', space=sflag, size = 0x4, scoped, tag = 'scoped memory for feature_decoder_forward.1']
    %10 = vsyncpa [#allocation3], 0
    // Predicated region
    $region2: #{feature_decoder_forward.1} parent=1 // pred_check
      _
    $region3: #{feature_decoder_forward.1} parent=1 // pred_check_branch
      %12 = sbr.rel (0) target = $region5
    $region4: #{feature_decoder_forward.1} parent=1 // pred_region
      _
    $region5: #{feature_decoder_forward.1} parent=1 // pred_fallthru
      _
    // Predicated region
    $region6: #{feature_decoder_forward.1} parent=1 // pred_check
      _
    $region7: #{feature_decoder_forward.1} parent=1 // pred_check_branch
      %14 = sbr.rel (0) target = $region9
    $region8: #{feature_decoder_forward.1} parent=1 // pred_region
      _
    $region9: #{feature_decoder_forward.1} parent=1 // pred_fallthru
      _
    // Predicated region
    $region10: #{feature_decoder_forward.1} parent=1 // pred_check
      _
    $region11: #{feature_decoder_forward.1} parent=1 // pred_check_branch
      %16 = sbr.rel (0) target = $region13
    $region12: #{feature_decoder_forward.1} parent=1 // pred_region
      _
    $region13: #{feature_decoder_forward.1} parent=1 // pred_fallthru
      _
    // Predicated region
    $region14: #{feature_decoder_forward.1} parent=1 // pred_check
      _
    $region15: #{feature_decoder_forward.1} parent=1 // pred_check_branch
      %18 = sbr.rel (0) target = $region17
    $region16: #{feature_decoder_forward.1} parent=1 // pred_region
      _
    $region17: #{feature_decoder_forward.1} parent=1 // pred_fallthru
      _
    // Predicated region
    $region18: #{feature_decoder_forward.1} parent=1 // pred_check
      _
    $region19: #{feature_decoder_forward.1} parent=1 // pred_check_branch
      %20 = sbr.rel (0) target = $region21
    $region20: #{feature_decoder_forward.1} parent=1 // pred_region
      _
    $region21: #{feature_decoder_forward.1} parent=1 // pred_fallthru
      _
    %v21 = vld [vmem:[%s0] sm:$0xff]
    %v22 = vld [vmem:[%s0 + $0x8] sm:$0xff]
    %v23 = vld [vmem:[%s1] sm:$0xff]
    %v24 = vld [vmem:[%s1 + $0x8] sm:$0xff]
    %v25 = vld [vmem:[%s1 + $0x10] sm:$0xff]
    %v26 = vld [vmem:[%s1 + $0x18] sm:$0xff]
    %v27 = vld [vmem:[%s2] sm:$0x1]
    %v29 = vlaneseq
    %v30 = vshrl.u32 %v29, 7
    %v31 = vsub.s32 0, %v30
    %v32 = vrot.slane %v27, %v31
    %vm34 = vcmask 261120
    %v36 = vsel %vm34, %v21, 0
    %v39 = vsel %vm34, %v22, 0
    %41 = vmatprep.subr.mxu0 0.0
    %42 = vmatpush1.msra.mxu0 0.0
    %43 = vmatprep.subr.mxu0 0.0
    %44 = vmatpush1.msra.mxu0 0.0
    %45 = vmatprep.subr.mxu0 0.0
    %46 = vmatpush1.msra.mxu0 0.0
    %47 = vmatprep.subr.mxu0 0.0
    %48 = vmatpush1.msra.mxu0 0.0
    %49 = vmatprep.subr.mxu0 0.0
    %50 = vmatpush1.msra.mxu0 0.0
    %51 = vmatprep.subr.mxu0 0.0
    %52 = vmatpush1.msra.mxu0 0.0
    %53 = vmatprep.subr.mxu0 0.0
    %54 = vmatpush1.msra.mxu0 0.0
    %55 = vmatprep.subr.mxu0 0.0
    %56 = vmatpush1.msra.mxu0 0.0
    %57 = vmatprep.subr.mxu0 0.0
    %58 = vmatpush1.msra.mxu0 0.0
    %59 = vmatprep.subr.mxu0 0.0
    %60 = vmatpush1.msra.mxu0 0.0
    %61 = vmatprep.subr.mxu0 0.0
    %62 = vmatpush1.msra.mxu0 0.0
    %63 = vmatprep.subr.mxu0 0.0
    %64 = vmatpush1.msra.mxu0 0.0
    %65 = vmatprep.subr.mxu0 0.0
    %66 = vmatpush1.msra.mxu0 %v26
    %67 = vmatprep.subr.mxu0 0.0
    %68 = vmatpush1.msra.mxu0 %v25
    %69 = vmatprep.subr.mxu0 0.0
    %70 = vmatpush1.msra.mxu0 %v24
    %71 = vmatprep.subr.mxu0 0.0
    %72 = vmatpush1.msra.mxu0 %v23
    %73 = vmatprep.subr.mxu0 0.0
    %74 = vmatpush2.msra.mxu0 0.0
    %75 = vmatprep.subr.mxu0 0.0
    %76 = vmatpush2.msra.mxu0 0.0
    %77 = vmatprep.subr.mxu0 0.0
    %78 = vmatpush2.msra.mxu0 0.0
    %79 = vmatprep.subr.mxu0 0.0
    %80 = vmatpush2.msra.mxu0 0.0
    %81 = vmatprep.subr.mxu0 0.0
    %82 = vmatpush2.msra.mxu0 0.0
    %83 = vmatprep.subr.mxu0 0.0
    %84 = vmatpush2.msra.mxu0 0.0
    %85 = vmatprep.subr.mxu0 0.0
    %86 = vmatpush2.msra.mxu0 0.0
    %87 = vmatprep.subr.mxu0 0.0
    %88 = vmatpush2.msra.mxu0 0.0
    %89 = vmatprep.subr.mxu0 0.0
    %90 = vmatpush2.msra.mxu0 0.0
    %91 = vmatprep.subr.mxu0 0.0
    %92 = vmatpush2.msra.mxu0 0.0
    %93 = vmatprep.subr.mxu0 0.0
    %94 = vmatpush2.msra.mxu0 0.0
    %95 = vmatprep.subr.mxu0 0.0
    %96 = vmatpush2.msra.mxu0 0.0
    %97 = vmatprep.subr.mxu0 0.0
    %98 = vmatpush2.msra.mxu0 0.0
    %99 = vmatprep.subr.mxu0 0.0
    %100 = vmatpush2.msra.mxu0 0.0
    %101 = vmatprep.subr.mxu0 0.0
    %102 = vmatpush2.msra.mxu0 0.0
    %103 = vmatprep.subr.mxu0 0.0
    %104 = vmatpush2.msra.mxu0 0.0
    %105 = vmatprep.mubr.f32.mxu0 0.0
    %106 = vmatmul.mubr.f32.gmra.mxu0 %v36
    %v107 = vpop.f32.mrf.mxu0
    %v108 = vadd.f32 %v32, %v107
    %v109 = vpop.f32.mrf.mxu0
    %110 = vmatprep.mubr.f32.mxu0 0.0
    %111 = vmatmul.mubr.f32.gmra.mxu0 %v39
    %v112 = vpop.f32.mrf.mxu0
    %v113 = vadd.f32 %v32, %v112
    %v114 = vpop.f32.mrf.mxu0
    %115 = vdwg.mxu0
    %v116 = vmul.f32 %v108, 0.1
    %v117 = vmul.f32 %v113, 0.1
    %v118 = vmax.f32 %v108, %v116
    %v119 = vmax.f32 %v113, %v117
    %v120 = vld [vmem:[%s3] sm:$0xff]
    %v121 = vld [vmem:[%s3 + $0x8] sm:$0xff]
    %v122 = vld [vmem:[%s4] sm:$0x1]
    %v124 = vlaneseq
    %v125 = vshrl.u32 %v124, 7
    %v126 = vsub.s32 0, %v125
    %v127 = vrot.slane %v122, %v126
    %vm129 = vcmask 130048
    %v131 = vsel %vm129, %v118, 0
    %v134 = vsel %vm129, %v119, 0
    %136 = vmatprep.subr.mxu0 0.0
    %137 = vmatpush1.msra.mxu0 0.0
    %138 = vmatprep.subr.mxu0 0.0
    %139 = vmatpush1.msra.mxu0 0.0
    %140 = vmatprep.subr.mxu0 0.0
    %141 = vmatpush1.msra.mxu0 0.0
    %142 = vmatprep.subr.mxu0 0.0
    %143 = vmatpush1.msra.mxu0 0.0
    %144 = vmatprep.subr.mxu0 0.0
    %145 = vmatpush1.msra.mxu0 0.0
    %146 = vmatprep.subr.mxu0 0.0
    %147 = vmatpush1.msra.mxu0 0.0
    %148 = vmatprep.subr.mxu0 0.0
    %149 = vmatpush1.msra.mxu0 0.0
    %150 = vmatprep.subr.mxu0 0.0
    %151 = vmatpush1.msra.mxu0 0.0
    %152 = vmatprep.subr.mxu0 0.0
    %153 = vmatpush1.msra.mxu0 0.0
    %154 = vmatprep.subr.mxu0 0.0
    %155 = vmatpush1.msra.mxu0 0.0
    %156 = vmatprep.subr.mxu0 0.0
    %157 = vmatpush1.msra.mxu0 0.0
    %158 = vmatprep.subr.mxu0 0.0
    %159 = vmatpush1.msra.mxu0 0.0
    %160 = vmatprep.subr.mxu0 0.0
    %161 = vmatpush1.msra.mxu0 0.0
    %162 = vmatprep.subr.mxu0 0.0
    %163 = vmatpush1.msra.mxu0 0.0
    %164 = vmatprep.subr.mxu0 0.0
    %165 = vmatpush1.msra.mxu0 %v121
    %166 = vmatprep.subr.mxu0 0.0
    %167 = vmatpush1.msra.mxu0 %v120
    %168 = vmatprep.subr.mxu0 0.0
    %169 = vmatpush2.msra.mxu0 0.0
    %170 = vmatprep.subr.mxu0 0.0
    %171 = vmatpush2.msra.mxu0 0.0
    %172 = vmatprep.subr.mxu0 0.0
    %173 = vmatpush2.msra.mxu0 0.0
    %174 = vmatprep.subr.mxu0 0.0
    %175 = vmatpush2.msra.mxu0 0.0
    %176 = vmatprep.subr.mxu0 0.0
    %177 = vmatpush2.msra.mxu0 0.0
    %178 = vmatprep.subr.mxu0 0.0
    %179 = vmatpush2.msra.mxu0 0.0
    %180 = vmatprep.subr.mxu0 0.0
    %181 = vmatpush2.msra.mxu0 0.0
    %182 = vmatprep.subr.mxu0 0.0
    %183 = vmatpush2.msra.mxu0 0.0
    %184 = vmatprep.subr.mxu0 0.0
    %185 = vmatpush2.msra.mxu0 0.0
    %186 = vmatprep.subr.mxu0 0.0
    %187 = vmatpush2.msra.mxu0 0.0
    %188 = vmatprep.subr.mxu0 0.0
    %189 = vmatpush2.msra.mxu0 0.0
    %190 = vmatprep.subr.mxu0 0.0
    %191 = vmatpush2.msra.mxu0 0.0
    %192 = vmatprep.subr.mxu0 0.0
    %193 = vmatpush2.msra.mxu0 0.0
    %194 = vmatprep.subr.mxu0 0.0
    %195 = vmatpush2.msra.mxu0 0.0
    %196 = vmatprep.subr.mxu0 0.0
    %197 = vmatpush2.msra.mxu0 0.0
    %198 = vmatprep.subr.mxu0 0.0
    %199 = vmatpush2.msra.mxu0 0.0
    %200 = vmatprep.mubr.f32.mxu0 0.0
    %201 = vmatmul.mubr.f32.gmra.mxu0 %v131
    %v202 = vpop.f32.mrf.mxu0
    %v203 = vadd.f32 %v127, %v202
    %v204 = vpop.f32.mrf.mxu0
    %205 = vmatprep.mubr.f32.mxu0 0.0
    %206 = vmatmul.mubr.f32.gmra.mxu0 %v134
    %v207 = vpop.f32.mrf.mxu0
    %v208 = vadd.f32 %v127, %v207
    %v209 = vpop.f32.mrf.mxu0
    %210 = vdwg.mxu0
    %211 = vst.msk [vmem:[#allocation2] sm:$0xff] %vm129, %v203
    %212 = vst.msk [vmem:[#allocation2 + $0x8] sm:$0xff] %vm129, %v208
    // Predicated region
    $region22: #{feature_decoder_forward.1} parent=1 // pred_check
      _
    $region23: #{feature_decoder_forward.1} parent=1 // pred_check_branch
      %214 = sbr.rel (0) target = $region25
    $region24: #{feature_decoder_forward.1} parent=1 // pred_region
      %s216 = ssub.s32 256, 256
      %217 = vsyncadd [#allocation3], %s216
      %s218 = sshll.u32 [#allocation2], 4
      %s219 = int_to_ptr.vmem [resolvable:$true] %s218
      %224 = dma.vmem_to_hbm [thread:$0]  %s219, 256, %s5, [#allocation3], 128, 128, 8
    $region25: #{feature_decoder_forward.1} parent=1 // pred_fallthru
      _
    // Predicated region
    $region26: #{feature_decoder_forward.1} parent=1 // pred_check
      _
    $region27: #{feature_decoder_forward.1} parent=1 // pred_check_branch
      %226 = sbr.rel (0) target = $region29
    $region28: #{feature_decoder_forward.1} parent=1 // pred_region
      %227 = dma.done [#allocation3], 256
    $region29: #{feature_decoder_forward.1} parent=1 // pred_fallthru
      _
    %228 = vsyncpa [#allocation3], 1

</llo_original>
